<compile_context>
chip_gen: v7x
topology: tpu7x:2x2x1
jax: 0.10.0
libtpu: 0.0.40
codegen_flags: <defaults>
</compile_context>

<pallas_src>
import jax
import jax.numpy as jnp
from jax.experimental import pallas as pl
from jax.experimental.pallas import tpu as pltpu


def gaussian_attention_kernel(x_ref, out_ref):
    """One program = `tb` batch elements.  x_ref: (tb, N, C), out_ref: (tb, C)."""
    x = x_ref[...]                                            # (tb, N, C) f32
    n = x.shape[1]

    # Batch statistics over the point axis (N -> sublane-axis reduce).
    mean = jnp.mean(x, axis=1, keepdims=True)                 # (tb, 1, C)
    diff = x - mean                                           # (tb, N, C)
    sq = diff * diff
    # torch.Tensor.var default is unbiased (divide by N-1), then + 1e-6.
    var = jnp.sum(sq, axis=1, keepdims=True) * (1.0 / (n - 1)) + 1e-6

    # Gaussian weights, then softmax over the channel axis (dim=-1).
    # w ∈ (0, 1], so exp(w) cannot overflow; softmax is shift-invariant, so
    # skipping the max-subtraction gives results identical to torch.nn.Softmax
    # while saving one cross-lane max reduce per tile.
    w = jnp.exp(-sq / (2.0 * var + 1e-6))                     # (tb, N, C)
    e = jnp.exp(w)
    w = e / jnp.sum(e, axis=-1, keepdims=True)

    # Weighted sum over the point axis -> (tb, C) store.
    out_ref[...] = jnp.sum(w * x, axis=1)


def _pick_batch_tile(B, N, C, budget_bytes=4 << 20):
    """Largest divisor of B whose (tb, N, C) f32 tile fits the VMEM budget."""
    per_batch = N * C * 4
    max_tb = max(1, budget_bytes // max(per_batch, 1))
    tb = 1
    for d in range(1, B + 1):
        if B % d == 0 and d <= max_tb:
            tb = d
    return tb


def gaussian_attention(x):
    """x: (B, N, C) float32  ->  out: (B, C) float32."""
    B, N, C = x.shape
    tb = _pick_batch_tile(B, N, C)

    # Working set per step: (tb, N, C) input (double-buffered by the pipeline)
    # plus a handful of same-sized intermediates (diff, sq, w, e) and the tiny
    # (tb, C) output.  Leave generous headroom but stay well under the 64 MiB
    # v7x physical VMEM.
    tile_bytes = tb * N * C * 4
    vmem_limit = min(max(8 * tile_bytes + (2 << 20), 4 << 20), 48 << 20)

    return pl.pallas_call(
        gaussian_attention_kernel,
        out_shape=jax.ShapeDtypeStruct((B, C), x.dtype),
        grid=(B // tb,),
        in_specs=[
            pl.BlockSpec((tb, N, C), lambda b: (b, 0, 0)),
        ],
        out_specs=pl.BlockSpec((tb, C), lambda b: (b, 0)),
        compiler_params=pltpu.CompilerParams(
            # Batch tiles are independent -> shard across TensorCores on v7x;
            # harmless no-op on single-TC v5e/v6e.
            dimension_semantics=("parallel",),
            vmem_limit_bytes=vmem_limit,
        ),
    )(x)


def gaussian_attention_ref(x):
    """Pure-JAX reference mirroring the PyTorch module."""
    mean = jnp.mean(x, axis=1, keepdims=True)
    var = jnp.var(x, axis=1, keepdims=True, ddof=1) + 1e-6
    w = jnp.exp(-((x - mean) ** 2) / (2.0 * var + 1e-6))
    w = jax.nn.softmax(w, axis=-1)
    return jnp.sum(w * x, axis=1)


if __name__ == "__main__":
    # Small shapes consistent with the module: x is (B, N, C) with C = in_dim.
    # C = 128 keeps the lane axis dense (full 128-wide vregs / unmasked stores).
    B, N, C = 2, 16, 128

    key = jax.random.PRNGKey(0)
    x = jax.random.normal(key, (B, N, C), jnp.float32)

    out = jax.jit(gaussian_attention)(x)
    jax.block_until_ready(out)

    ref = gaussian_attention_ref(x)
    assert out.shape == (B, C)
    assert jnp.allclose(out, ref, rtol=1e-4, atol=1e-4), (
        f"max abs err {jnp.max(jnp.abs(out - ref))}"
    )
    print("KERNEL_OK")
</pallas_src>

<mosaic_0001>
module attributes {stable_mosaic.version = 11 : i64} {
  func.func @gaussian_attention_kernel(%arg0: i32, %arg1: memref<2x16x128xf32, #tpu.memory_space<vmem>>, %arg2: memref<2x128xf32, #tpu.memory_space<vmem>>) attributes {dimension_semantics = [#tpu.dimension_semantics<parallel>], iteration_bounds = array<i64: 1>, scalar_prefetch = 0 : i64, scratch_operands = 0 : i64, tpu.core_type = #tpu.core_type<tc>, window_params = [{transform_indices = @transform_0, window_bounds = array<i64: 2, 16, 128>}, {transform_indices = @transform_1, window_bounds = array<i64: 2, 128>}]} {
    %c0 = arith.constant 0 : index
    %c0_0 = arith.constant 0 : index
    %c0_1 = arith.constant 0 : index
    %0 = vector.load %arg1[%c0, %c0_0, %c0_1] : memref<2x16x128xf32, #tpu.memory_space<vmem>>, vector<2x16x128xf32>
    %cst = arith.constant dense<0.000000e+00> : vector<2x128xf32>
    %1 = vector.multi_reduction <add>, %0, %cst [1] : vector<2x16x128xf32> to vector<2x128xf32>
    %2 = vector.shape_cast %1 : vector<2x128xf32> to vector<2x1x128xf32>
    %cst_2 = arith.constant 1.600000e+01 : f32
    %3 = vector.broadcast %cst_2 : f32 to vector<2x1x128xf32>
    %4 = arith.divf %2, %3 : vector<2x1x128xf32>
    %5 = vector.broadcast %4 : vector<2x1x128xf32> to vector<2x16x128xf32>
    %6 = arith.subf %0, %5 : vector<2x16x128xf32>
    %7 = arith.mulf %6, %6 : vector<2x16x128xf32>
    %cst_3 = arith.constant dense<0.000000e+00> : vector<2x128xf32>
    %8 = vector.multi_reduction <add>, %7, %cst_3 [1] : vector<2x16x128xf32> to vector<2x128xf32>
    %9 = vector.shape_cast %8 : vector<2x128xf32> to vector<2x1x128xf32>
    %cst_4 = arith.constant 0.0666666701 : f32
    %10 = vector.broadcast %cst_4 : f32 to vector<2x1x128xf32>
    %11 = arith.mulf %9, %10 : vector<2x1x128xf32>
    %cst_5 = arith.constant 9.99999997E-7 : f32
    %12 = vector.broadcast %cst_5 : f32 to vector<2x1x128xf32>
    %13 = arith.addf %11, %12 : vector<2x1x128xf32>
    %cst_6 = arith.constant 0.000000e+00 : f32
    %14 = vector.broadcast %cst_6 : f32 to vector<2x16x128xf32>
    %15 = arith.subf %14, %7 : vector<2x16x128xf32>
    %cst_7 = arith.constant 2.000000e+00 : f32
    %16 = vector.broadcast %cst_7 : f32 to vector<2x1x128xf32>
    %17 = arith.mulf %16, %13 : vector<2x1x128xf32>
    %cst_8 = arith.constant 9.99999997E-7 : f32
    %18 = vector.broadcast %cst_8 : f32 to vector<2x1x128xf32>
    %19 = arith.addf %17, %18 : vector<2x1x128xf32>
    %20 = vector.broadcast %19 : vector<2x1x128xf32> to vector<2x16x128xf32>
    %21 = arith.divf %15, %20 : vector<2x16x128xf32>
    %22 = math.exp %21 : vector<2x16x128xf32>
    %23 = math.exp %22 : vector<2x16x128xf32>
    %cst_9 = arith.constant dense<0.000000e+00> : vector<2x16xf32>
    %24 = vector.multi_reduction <add>, %23, %cst_9 [2] : vector<2x16x128xf32> to vector<2x16xf32>
    %25 = vector.shape_cast %24 : vector<2x16xf32> to vector<2x16x1xf32>
    %26 = vector.broadcast %25 : vector<2x16x1xf32> to vector<2x16x128xf32>
    %27 = arith.divf %23, %26 : vector<2x16x128xf32>
    %28 = arith.mulf %27, %0 : vector<2x16x128xf32>
    %cst_10 = arith.constant dense<0.000000e+00> : vector<2x128xf32>
    %29 = vector.multi_reduction <add>, %28, %cst_10 [1] : vector<2x16x128xf32> to vector<2x128xf32>
    %c0_11 = arith.constant 0 : index
    %c0_12 = arith.constant 0 : index
    %30 = vector.load %arg2[%c0_11, %c0_12] : memref<2x128xf32, #tpu.memory_space<vmem>>, vector<2x128xf32>
    tpu.vector_store %arg2[%c0_11, %c0_12], %29 {strides = array<i32>} : memref<2x128xf32, #tpu.memory_space<vmem>>, vector<2x128xf32>,
    return
  }
  func.func @transform_0(%arg0: i32) -> (i32, i32, i32) {
    %c0_i32 = arith.constant 0 : i32
    %c0_i32_0 = arith.constant 0 : i32
    %c0_i32_1 = arith.constant 0 : i32
    return %arg0, %c0_i32, %c0_i32_0 : i32, i32, i32
  }
  func.func @transform_1(%arg0: i32) -> (i32, i32) {
    %c0_i32 = arith.constant 0 : i32
    %c0_i32_0 = arith.constant 0 : i32
    return %arg0, %c0_i32 : i32, i32
  }
}

</mosaic_0001>

<llo_original>
// kernel: gaussian_attention.1
$region0: #{gaussian_attention.1}
  #allocation0 [shape = 'u32[]', space=smem, size = 0x4, offset = 0x4, fixed_abs, tag = 'smem constant byte address 0x4 - core index']
  #allocation1 [shape = 'u32[144,128]{1,0:T(1,128)}', space=vmem, size = 0x12000, scoped, tag = 'internal scratch']
  %s0 = inlined_call_operand.hbm [shape: f32[2,16,128], index: 0, kind: input, shape index: {}]
  %s1 = inlined_call_operand.hbm [shape: f32[2,128], index: 1, kind: output, shape index: {}]
  %s2 = sld [smem:[#allocation0]]
  $region18: #{gaussian_attention.1} parent=0
    _
  %s4 = ssub.s32 1, %s2
  %s5 = scalar_select 0, %s4, %s2
  $region1: #{gaussian_attention.1} parent=0
    #allocation2 [shape = 'u8[16384]{0}', space=vmem, size = 0x4000, scoped, tag = 'input window, operand 0, single buffered']
    #allocation3 [shape = 's32[1]{0}', space=sflag, size = 0x4, scoped, tag = 'scoped memory for gaussian_attention.1']
    #allocation4 [shape = 's32[1]{0}', space=sflag, size = 0x4, scoped, tag = 'scoped memory for gaussian_attention.1']
    #allocation5 [shape = 'u8[1024]{0}', space=vmem, size = 0x400, scoped, tag = 'output window, operand 0, single buffered']
    %6 = vsyncpa [#allocation3], 0
    %7 = vsyncpa [#allocation4], 0
    // Predicated region
    $region2: #{gaussian_attention.1} parent=1 // pred_check
      _
    $region3: #{gaussian_attention.1} parent=1 // pred_check_branch
      %9 = sbr.rel (0) target = $region5
    $region4: #{gaussian_attention.1} parent=1 // pred_region
      %s11 = ssub.s32 512, 512
      %12 = vsyncadd [#allocation3], %s11
      %s13 = sshll.u32 [#allocation2], 4
      %s14 = int_to_ptr.vmem [resolvable:$true] %s13
      %19 = dma.hbm_to_vmem [thread:$0]  %s0, 512, %s14, [#allocation3], 128, 128, 8
    $region5: #{gaussian_attention.1} parent=1 // pred_fallthru
      _
    // Predicated region
    $region6: #{gaussian_attention.1} parent=1 // pred_check
      _
    $region7: #{gaussian_attention.1} parent=1 // pred_check_branch
      %21 = sbr.rel (0) target = $region9
    $region8: #{gaussian_attention.1} parent=1 // pred_region
      %22 = dma.done [#allocation3], 512
    $region9: #{gaussian_attention.1} parent=1 // pred_fallthru
      _
    %v23 = vld [vmem:[#allocation2] sm:$0xff]
    %v24 = vld [vmem:[#allocation2 + $0x8] sm:$0xff]
    %v25 = vld [vmem:[#allocation2 + $0x10] sm:$0xff]
    %v26 = vld [vmem:[#allocation2 + $0x18] sm:$0xff]
    %v27 = vadd.f32 %v23, %v24
    %v28 = vrot.slane %v27, 4
    %v29 = vadd.f32 %v27, %v28
    %v30 = vrot.slane %v29, 2
    %v31 = vadd.f32 %v29, %v30
    %v32 = vrot.slane %v31, 1
    %v33 = vadd.f32 %v31, %v32
    %v34 = vadd.f32 %v25, %v26
    %v35 = vrot.slane %v34, 4
    %v36 = vadd.f32 %v34, %v35
    %v37 = vrot.slane %v36, 2
    %v38 = vadd.f32 %v36, %v37
    %v39 = vrot.slane %v38, 1
    %v40 = vadd.f32 %v38, %v39
    %v41 = vrcp.pop 16.0
    %v42 = vmul.f32 %v33, %v41
    %v43 = vmul.f32 %v40, %v41
    %v44 = vsub.f32 %v23, %v42
    %v45 = vsub.f32 %v24, %v42
    %v46 = vsub.f32 %v25, %v43
    %v47 = vsub.f32 %v26, %v43
    %v48 = vmul.f32 %v44, %v44
    %v49 = vmul.f32 %v45, %v45
    %v50 = vmul.f32 %v46, %v46
    %v51 = vmul.f32 %v47, %v47
    %v52 = vadd.f32 %v48, %v49
    %v53 = vrot.slane %v52, 4
    %v54 = vadd.f32 %v52, %v53
    %v55 = vrot.slane %v54, 2
    %v56 = vadd.f32 %v54, %v55
    %v57 = vrot.slane %v56, 1
    %v58 = vadd.f32 %v56, %v57
    %v59 = vadd.f32 %v50, %v51
    %v60 = vrot.slane %v59, 4
    %v61 = vadd.f32 %v59, %v60
    %v62 = vrot.slane %v61, 2
    %v63 = vadd.f32 %v61, %v62
    %v64 = vrot.slane %v63, 1
    %v65 = vadd.f32 %v63, %v64
    %v66 = vmul.f32 %v58, 0.06666667
    %v67 = vmul.f32 %v65, 0.06666667
    %v68 = vadd.f32 %v66, 1e-06
    %v69 = vadd.f32 %v67, 1e-06
    %v70 = vsub.f32 0.0, %v48
    %v71 = vsub.f32 0.0, %v49
    %v72 = vsub.f32 0.0, %v50
    %v73 = vsub.f32 0.0, %v51
    %v74 = vmul.f32 %v68, 2.0
    %v75 = vmul.f32 %v69, 2.0
    %v76 = vadd.f32 %v74, 1e-06
    %v77 = vadd.f32 %v75, 1e-06
    %v78 = vrcp.pop %v76
    %v79 = vmul.f32 %v70, %v78
    %v80 = vmul.f32 %v71, %v78
    %v81 = vrcp.pop %v77
    %v82 = vmul.f32 %v72, %v81
    %v83 = vmul.f32 %v73, %v81
    %v84 = vmul.f32 %v79, 1.442695
    %v85 = vpow.pop %v84
    %v86 = vmul.f32 %v80, 1.442695
    %v87 = vpow.pop %v86
    %v88 = vmul.f32 %v82, 1.442695
    %v89 = vpow.pop %v88
    %v90 = vmul.f32 %v83, 1.442695
    %v91 = vpow.pop %v90
    %v92 = vmul.f32 %v85, 1.442695
    %v93 = vpow.pop %v92
    %v94 = vmul.f32 %v87, 1.442695
    %v95 = vpow.pop %v94
    %v96 = vmul.f32 %v89, 1.442695
    %v97 = vpow.pop %v96
    %v98 = vmul.f32 %v91, 1.442695
    %v99 = vpow.pop %v98
    %100 = vadd.xlane.f32.xlu0 %v93
    %v101 = vpop.xlane.xlu0 %100
    %102 = vadd.xlane.f32.xlu0 %v95
    %v103 = vpop.xlane.xlu0 %102
    %104 = vadd.xlane.f32.xlu0 %v97
    %v105 = vpop.xlane.xlu0 %104
    %106 = vadd.xlane.f32.xlu0 %v99
    %v107 = vpop.xlane.xlu0 %106
    %v108 = vrcp.pop %v101
    %v109 = vmul.f32 %v93, %v108
    %v110 = vrcp.pop %v103
    %v111 = vmul.f32 %v95, %v110
    %v112 = vrcp.pop %v105
    %v113 = vmul.f32 %v97, %v112
    %v114 = vrcp.pop %v107
    %v115 = vmul.f32 %v99, %v114
    %v116 = vmul.f32 %v109, %v23
    %v117 = vmul.f32 %v111, %v24
    %v118 = vmul.f32 %v113, %v25
    %v119 = vmul.f32 %v115, %v26
    %v120 = vadd.f32 %v116, %v117
    %v121 = vrot.slane %v120, 4
    %v122 = vadd.f32 %v120, %v121
    %v123 = vrot.slane %v122, 2
    %v124 = vadd.f32 %v122, %v123
    %v125 = vrot.slane %v124, 1
    %v126 = vadd.f32 %v124, %v125
    %v127 = vadd.f32 %v118, %v119
    %v128 = vrot.slane %v127, 4
    %v129 = vadd.f32 %v127, %v128
    %v130 = vrot.slane %v129, 2
    %v131 = vadd.f32 %v129, %v130
    %v132 = vrot.slane %v131, 1
    %v133 = vadd.f32 %v131, %v132
    %vm136 = vcmask 1041409
    %v137 = vsel %vm136, %v133, %v126
    %139 = vst [vmem:[#allocation5] sm:$0x3] %v137
    // Predicated region
    $region10: #{gaussian_attention.1} parent=1 // pred_check
      _
    $region11: #{gaussian_attention.1} parent=1 // pred_check_branch
      %141 = sbr.rel (0) target = $region13
    $region12: #{gaussian_attention.1} parent=1 // pred_region
      %s143 = ssub.s32 32, 32
      %144 = vsyncadd [#allocation4], %s143
      %s146 = sshll.u32 [#allocation5], 4
      %s147 = int_to_ptr.vmem [resolvable:$true] %s146
      %149 = dma.vmem_to_hbm [thread:$0]  %s147, 32, %s1, [#allocation4]
    $region13: #{gaussian_attention.1} parent=1 // pred_fallthru
      _
    // Predicated region
    $region14: #{gaussian_attention.1} parent=1 // pred_check
      _
    $region15: #{gaussian_attention.1} parent=1 // pred_check_branch
      %151 = sbr.rel (0) target = $region17
    $region16: #{gaussian_attention.1} parent=1 // pred_region
      %152 = dma.done [#allocation4], 32
    $region17: #{gaussian_attention.1} parent=1 // pred_fallthru
      _
    %153 = vsyncpa [#allocation3], 1
    %154 = vsyncpa [#allocation4], 1

</llo_original>
